<compile_context>
chip_gen: v5e
topology: v5e:2x2
jax: 0.10.0
libtpu: 0.0.40
codegen_flags: <defaults>
</compile_context>

<pallas_src>
import math

import jax
import jax.numpy as jnp
import numpy as np
from jax.experimental import pallas as pl
from jax.experimental.pallas import tpu as pltpu

NCE_THRESHOLD = 0.99
INIT_TEMPERATURE = 0.1          # module __init__ default
NEG_LARGE = -1e30               # finite "masked" logit; exp underflows to 0


def _round_up(x, m):
    return (x + m - 1) // m * m


def _infonce_kernel(lhs_ref, negt_ref, nvalid_ref, poslogit_ref, vmask_ref,
                    loss_ref, max_sc, sum_sc):
    # lhs_ref      : VMEM (2*tR, Hp)  rows [0:tR]   = temp-scaled normalized preds
    #                                 rows [tR:2tR] = normalized positives
    # negt_ref     : VMEM (Hp, tM)    normalized negatives, pre-transposed
    # nvalid_ref   : VMEM (1, tM) f32 1 = real negative column, 0 = padding
    # poslogit_ref : VMEM (tR, 1) f32 temp * cos(pred, pos) (precomputed)
    # vmask_ref    : VMEM (tR, 1) f32 attention_mask[:, :-1]; 0 for padded rows
    # loss_ref     : VMEM (tR, 1) f32 per-row masked CE loss (written at m==last)
    # max_sc/sum_sc: VMEM (tR, 1) f32 online-logsumexp running state
    m_idx = pl.program_id(1)
    t_r = max_sc.shape[0]

    @pl.when(m_idx == 0)
    def _init():
        # The positive logit is always part of the row's logsumexp.
        max_sc[...] = poslogit_ref[...]
        sum_sc[...] = jnp.ones_like(sum_sc)

    # Single fused MXU pass: pred and pos tiles share the negatives weights.
    scores = jnp.dot(lhs_ref[...], negt_ref[...],
                     preferred_element_type=jnp.float32)      # (2*tR, tM) f32
    neg_logits = scores[:t_r, :]       # temp already folded into the pred rows
    pos_neg_sim = scores[t_r:, :]      # unscaled cosine(pos, neg) for the 0.99 mask

    invalid = (pos_neg_sim > NCE_THRESHOLD) | (nvalid_ref[...] == 0.0)
    neg_logits = jnp.where(invalid, NEG_LARGE, neg_logits)

    # Online logsumexp update over the negatives (lane) axis.
    m_prev = max_sc[...]
    m_new = jnp.maximum(m_prev, jnp.max(neg_logits, axis=-1, keepdims=True))
    sum_sc[...] = (jnp.exp(m_prev - m_new) * sum_sc[...]
                   + jnp.sum(jnp.exp(neg_logits - m_new), axis=-1, keepdims=True))
    max_sc[...] = m_new

    @pl.when(m_idx == pl.num_programs(1) - 1)
    def _finalize():
        lse = max_sc[...] + jnp.log(sum_sc[...])
        per_row = lse - poslogit_ref[...]
        # jnp.where (not multiply): padded / masked rows contribute exactly 0.
        loss_ref[...] = jnp.where(vmask_ref[...] > 0.0, per_row, 0.0)


def generative_infonce_loss(log_temperature, predictions, positives, negatives,
                            attention_mask, *, block_r=512, block_m=512,
                            compute_dtype=None):
    """predictions/positives: (B,S,H); negatives: (B,N,H); attention_mask: (B,S)."""
    # TODO(synk): distributed all_gather of negatives and the ndim==2 packed
    # varlen path are not implemented (single-device, batched ndim==3 path only).
    B, S, H = predictions.shape
    N = negatives.shape[1]
    R = B * (S - 1)
    M = B * N
    if compute_dtype is None:
        compute_dtype = predictions.dtype   # native dtype for DMA + MXU inputs

    # clamp log-temp to [0, log 50] and exponentiate (matches torch clamp_ + exp)
    temp = jnp.exp(jnp.clip(log_temperature.astype(jnp.float32), 0.0,
                            math.log(50.0)))

    # ---- one fused f32 preprocessing pass in the wrapper (done once) --------
    pred = predictions[:, :-1, :].reshape(R, H).astype(jnp.float32)
    pos = positives[:, 1:, :].reshape(R, H).astype(jnp.float32)
    neg = negatives.reshape(M, H).astype(jnp.float32)

    pred_n = pred * jax.lax.rsqrt(jnp.sum(pred * pred, axis=-1, keepdims=True))
    pos_n = pos * jax.lax.rsqrt(jnp.sum(pos * pos, axis=-1, keepdims=True))
    neg_n = neg * jax.lax.rsqrt(jnp.sum(neg * neg, axis=-1, keepdims=True))

    # Fold the temperature into the prediction rows only (the 0.99 duplicate
    # compare must stay on unscaled positive/negative cosines).
    pred_s = pred_n * temp
    pos_logit = jnp.sum(pred_s * pos_n, axis=-1, keepdims=True)   # (R,1) f32
    vmask = attention_mask[:, :-1].reshape(R, 1).astype(jnp.float32)

    # ---- tiling / VMEM budgeting --------------------------------------------
    H_pad = _round_up(H, 128)
    tR = min(block_r, _round_up(R, 8))
    tM = min(block_m, _round_up(M, 128))
    itemsize = jnp.dtype(compute_dtype).itemsize

    def vmem_est(tr, tm):
        lhs_tile = 2 * tr * H_pad * itemsize           # stacked pred/pos tile
        neg_tile = H_pad * tm * itemsize               # negatives tile
        small = tm * 4 + 3 * tr * 4                    # nvalid + poslogit + vmask + out
        dbuf = 2 * (lhs_tile + neg_tile + small)       # double-buffered pipeline
        temps = 3 * (2 * tr) * tm * 4                  # f32 matmul result + mask/exp temps
        return dbuf + temps + 2 * tr * 4               # + LSE scratch

    try:
        vmem_cap = int(pltpu.get_tpu_info().vmem_capacity_bytes)
    except Exception:
        vmem_cap = 64 * 1024 * 1024                    # conservative (v7x per-TC)
    budget = max(vmem_cap - (8 << 20), 24 << 20)

    while vmem_est(tR, tM) > budget and (tM > 128 or tR > 8):
        if tM > 128:
            tM = max(128, _round_up(tM // 2, 128))
        else:
            tR = max(8, _round_up(tR // 2, 8))

    R_pad = _round_up(R, tR)
    M_pad = _round_up(M, tM)
    num_r = R_pad // tR
    num_m = M_pad // tM

    # ---- pad (zeros are safe: normalization already done on real rows/cols) --
    pred_p = jnp.pad(pred_s.astype(compute_dtype),
                     ((0, R_pad - R), (0, H_pad - H)))
    pos_p = jnp.pad(pos_n.astype(compute_dtype),
                    ((0, R_pad - R), (0, H_pad - H)))
    # Interleave per R tile so one contiguous (2*tR, Hp) block holds the pred
    # tile followed by its matching pos tile (single fused MXU pass in-kernel).
    lhs = jnp.concatenate(
        [pred_p.reshape(num_r, tR, H_pad), pos_p.reshape(num_r, tR, H_pad)],
        axis=1).reshape(num_r * 2 * tR, H_pad)

    # Negatives: normalized once, pre-transposed to native MXU weight layout.
    negt = jnp.pad(neg_n.astype(compute_dtype).T,
                   ((0, H_pad - H), (0, M_pad - M)))
    nvalid = jnp.pad(jnp.ones((1, M), jnp.float32), ((0, 0), (0, M_pad - M)))
    poslogit_p = jnp.pad(pos_logit, ((0, R_pad - R), (0, 0)))
    vmask_p = jnp.pad(vmask, ((0, R_pad - R), (0, 0)))

    vmem_limit = min(vmem_est(tR, tM) + (4 << 20), vmem_cap - (4 << 20))
    vmem_limit = int(min(max(vmem_limit, 32 << 20), vmem_cap))

    loss_rows = pl.pallas_call(
        _infonce_kernel,
        out_shape=jax.ShapeDtypeStruct((R_pad, 1), jnp.float32),
        grid_spec=pltpu.PrefetchScalarGridSpec(
            num_scalar_prefetch=0,
            grid=(num_r, num_m),
            in_specs=[
                pl.BlockSpec((2 * tR, H_pad), lambda r, m: (r, 0)),  # stacked pred/pos
                pl.BlockSpec((H_pad, tM), lambda r, m: (0, m)),      # negatives^T
                pl.BlockSpec((1, tM), lambda r, m: (0, m)),          # negative validity
                pl.BlockSpec((tR, 1), lambda r, m: (r, 0)),          # positive logit
                pl.BlockSpec((tR, 1), lambda r, m: (r, 0)),          # row validity
            ],
            out_specs=pl.BlockSpec((tR, 1), lambda r, m: (r, 0)),
            scratch_shapes=[
                pltpu.VMEM((tR, 1), jnp.float32),   # running max
                pltpu.VMEM((tR, 1), jnp.float32),   # running sum(exp)
            ]),
        compiler_params=pltpu.CompilerParams(
            dimension_semantics=("parallel", "arbitrary"),
            vmem_limit_bytes=vmem_limit),
    )(lhs, negt, nvalid, poslogit_p, vmask_p)

    # Tiny masked-mean in the wrapper keeps the R grid axis megacore-parallel.
    # NOTE: all-zero attention_mask[:, :-1] divides by zero (same as reference).
    count = jnp.sum(attention_mask[:, :-1].astype(jnp.float32))
    return jnp.sum(loss_rows) / count


def _reference_loss(log_temperature, predictions, positives, negatives,
                    attention_mask):
    """Pure-JAX mirror of the PyTorch forward (ndim==3 path, no dist)."""
    temp = jnp.exp(jnp.clip(log_temperature, 0.0, math.log(50.0)))
    H = predictions.shape[-1]
    pred = predictions[:, :-1, :]
    pos = positives[:, 1:, :]
    pred = pred / jnp.linalg.norm(pred, axis=-1, keepdims=True)
    pos = pos / jnp.linalg.norm(pos, axis=-1, keepdims=True)
    pos_scores = jnp.sum(pred * pos, axis=-1, keepdims=True)
    neg = negatives / jnp.linalg.norm(negatives, axis=-1, keepdims=True)
    neg_all = neg.reshape(-1, H).T
    neg_scores = pred @ neg_all
    mask = (pos @ neg_all) > NCE_THRESHOLD
    neg_scores = jnp.where(mask, jnp.finfo(neg_scores.dtype).min, neg_scores)
    logits = jnp.concatenate([pos_scores, neg_scores], axis=-1)
    valid = attention_mask[:, :-1].astype(bool).reshape(-1)
    logits = logits.reshape(-1, logits.shape[-1]) * temp
    per_row = jax.scipy.special.logsumexp(logits, axis=-1) - logits[:, 0]
    return jnp.sum(jnp.where(valid, per_row, 0.0)) / jnp.sum(valid)


if __name__ == "__main__":
    B, S, H, N_NEG = 2, 8, 32, 16

    key = jax.random.PRNGKey(0)
    k1, k2, k3 = jax.random.split(key, 3)
    predictions = jax.random.normal(k1, (B, S, H), dtype=jnp.float32)
    positives = jax.random.normal(k2, (B, S, H), dtype=jnp.float32)
    negatives = jax.random.normal(k3, (B, N_NEG, H), dtype=jnp.float32)
    # deterministic attention mask: lengths [8, 5]
    lengths = jnp.array([8, 5], dtype=jnp.int32)
    attention_mask = (jnp.arange(S)[None, :] < lengths[:, None]).astype(jnp.int32)

    # parameter from __init__: log(1 / temperature)
    log_temperature = jnp.array(math.log(1.0 / INIT_TEMPERATURE), dtype=jnp.float32)

    loss = generative_infonce_loss(
        log_temperature, predictions, positives, negatives, attention_mask)
    loss = jax.block_until_ready(loss)

    ref = _reference_loss(
        log_temperature, predictions, positives, negatives, attention_mask)
    np.testing.assert_allclose(np.asarray(loss), np.asarray(ref), rtol=1e-5, atol=1e-5)

    print("KERNEL_OK")
</pallas_src>

<mosaic_0001>
module attributes {stable_mosaic.version = 11 : i64} {
  func.func @_infonce_kernel(%arg0: i32, %arg1: i32, %arg2: memref<32x128xf32, #tpu.memory_space<vmem>>, %arg3: memref<128x128xf32, #tpu.memory_space<vmem>>, %arg4: memref<1x128xf32, #tpu.memory_space<vmem>>, %arg5: memref<16x1xf32, #tpu.memory_space<vmem>>, %arg6: memref<16x1xf32, #tpu.memory_space<vmem>>, %arg7: memref<16x1xf32, #tpu.memory_space<vmem>>, %arg8: memref<16x1xf32, #tpu.memory_space<vmem>>, %arg9: memref<16x1xf32, #tpu.memory_space<vmem>>) attributes {dimension_semantics = [#tpu.dimension_semantics<parallel>, #tpu.dimension_semantics<arbitrary>], iteration_bounds = array<i64: 1, 1>, scalar_prefetch = 0 : i64, scratch_operands = 2 : i64, tpu.core_type = #tpu.core_type<tc>, window_params = [{transform_indices = @transform_0, window_bounds = array<i64: 32, 128>}, {transform_indices = @transform_1, window_bounds = array<i64: 128, 128>}, {transform_indices = @transform_2, window_bounds = array<i64: 1, 128>}, {transform_indices = @transform_3, window_bounds = array<i64: 16, 1>}, {transform_indices = @transform_4, window_bounds = array<i64: 16, 1>}, {transform_indices = @transform_5, window_bounds = array<i64: 16, 1>}]} {
    %c0_i32 = arith.constant 0 : i32
    %0 = arith.cmpi eq, %arg1, %c0_i32 : i32
    %1 = arith.extui %0 : i1 to i32
    %c0_i32_0 = arith.constant 0 : i32
    %2 = arith.cmpi ne, %1, %c0_i32_0 : i32
    scf.if %2 {
      %c0_21 = arith.constant 0 : index
      %c0_22 = arith.constant 0 : index
      %36 = vector.load %arg5[%c0_21, %c0_22] : memref<16x1xf32, #tpu.memory_space<vmem>>, vector<16x1xf32>
      %c0_23 = arith.constant 0 : index
      %c0_24 = arith.constant 0 : index
      %37 = vector.load %arg8[%c0_23, %c0_24] : memref<16x1xf32, #tpu.memory_space<vmem>>, vector<16x1xf32>
      tpu.vector_store %arg8[%c0_23, %c0_24], %36 {strides = array<i32>} : memref<16x1xf32, #tpu.memory_space<vmem>>, vector<16x1xf32>,
      %cst_25 = arith.constant 1.000000e+00 : f32
      %38 = vector.broadcast %cst_25 : f32 to vector<16x1xf32>
      %c0_26 = arith.constant 0 : index
      %c0_27 = arith.constant 0 : index
      %39 = vector.load %arg9[%c0_26, %c0_27] : memref<16x1xf32, #tpu.memory_space<vmem>>, vector<16x1xf32>
      tpu.vector_store %arg9[%c0_26, %c0_27], %38 {strides = array<i32>} : memref<16x1xf32, #tpu.memory_space<vmem>>, vector<16x1xf32>,
    } else {
    }
    %c0 = arith.constant 0 : index
    %c0_1 = arith.constant 0 : index
    %3 = vector.load %arg2[%c0, %c0_1] : memref<32x128xf32, #tpu.memory_space<vmem>>, vector<32x128xf32>
    %c0_2 = arith.constant 0 : index
    %c0_3 = arith.constant 0 : index
    %4 = vector.load %arg3[%c0_2, %c0_3] : memref<128x128xf32, #tpu.memory_space<vmem>>, vector<128x128xf32>
    %cst = arith.constant dense<0.000000e+00> : vector<32x128xf32>
    %5 = tpu.matmul %3, %4, %cst {dimension_numbers = #tpu.dot_dimension_numbers<[1], [0], [0], [1], [0, 0, 1, 1], [], []>} : vector<32x128xf32>, vector<128x128xf32>, vector<32x128xf32> -> vector<32x128xf32>
    %6 = vector.extract_strided_slice %5 {offsets = [0, 0], sizes = [16, 128], strides = [1, 1]} : vector<32x128xf32> to vector<16x128xf32>
    %7 = vector.extract_strided_slice %5 {offsets = [16, 0], sizes = [16, 128], strides = [1, 1]} : vector<32x128xf32> to vector<16x128xf32>
    %cst_4 = arith.constant 9.900000e-01 : f32
    %8 = vector.broadcast %cst_4 : f32 to vector<16x128xf32>
    %9 = arith.cmpf ogt, %7, %8 : vector<16x128xf32>
    %c0_5 = arith.constant 0 : index
    %c0_6 = arith.constant 0 : index
    %10 = vector.load %arg4[%c0_5, %c0_6] : memref<1x128xf32, #tpu.memory_space<vmem>>, vector<1x128xf32>
    %cst_7 = arith.constant 0.000000e+00 : f32
    %11 = vector.broadcast %cst_7 : f32 to vector<1x128xf32>
    %12 = arith.cmpf oeq, %10, %11 : vector<1x128xf32>
    %13 = vector.broadcast %12 : vector<1x128xi1> to vector<16x128xi1>
    %14 = arith.ori %9, %13 : vector<16x128xi1>
    %cst_8 = arith.constant -1.000000e+30 : f32
    %15 = vector.broadcast %cst_8 : f32 to vector<16x128xf32>
    %16 = arith.select %14, %15, %6 : vector<16x128xi1>, vector<16x128xf32>
    %c0_9 = arith.constant 0 : index
    %c0_10 = arith.constant 0 : index
    %17 = vector.load %arg8[%c0_9, %c0_10] : memref<16x1xf32, #tpu.memory_space<vmem>>, vector<16x1xf32>
    %cst_11 = arith.constant dense<0xFF800000> : vector<16xf32>
    %18 = vector.multi_reduction <maximumf>, %16, %cst_11 [1] : vector<16x128xf32> to vector<16xf32>
    %19 = vector.shape_cast %18 : vector<16xf32> to vector<16x1xf32>
    %20 = arith.maximumf %17, %19 : vector<16x1xf32>
    %21 = arith.subf %17, %20 : vector<16x1xf32>
    %22 = math.exp %21 : vector<16x1xf32>
    %c0_12 = arith.constant 0 : index
    %c0_13 = arith.constant 0 : index
    %23 = vector.load %arg9[%c0_12, %c0_13] : memref<16x1xf32, #tpu.memory_space<vmem>>, vector<16x1xf32>
    %24 = arith.mulf %22, %23 : vector<16x1xf32>
    %25 = vector.broadcast %20 : vector<16x1xf32> to vector<16x128xf32>
    %26 = arith.subf %16, %25 : vector<16x128xf32>
    %27 = math.exp %26 : vector<16x128xf32>
    %cst_14 = arith.constant dense<0.000000e+00> : vector<16xf32>
    %28 = vector.multi_reduction <add>, %27, %cst_14 [1] : vector<16x128xf32> to vector<16xf32>
    %29 = vector.shape_cast %28 : vector<16xf32> to vector<16x1xf32>
    %30 = arith.addf %24, %29 : vector<16x1xf32>
    %c0_15 = arith.constant 0 : index
    %c0_16 = arith.constant 0 : index
    %31 = vector.load %arg9[%c0_15, %c0_16] : memref<16x1xf32, #tpu.memory_space<vmem>>, vector<16x1xf32>
    tpu.vector_store %arg9[%c0_15, %c0_16], %30 {strides = array<i32>} : memref<16x1xf32, #tpu.memory_space<vmem>>, vector<16x1xf32>,
    %c0_17 = arith.constant 0 : index
    %c0_18 = arith.constant 0 : index
    %32 = vector.load %arg8[%c0_17, %c0_18] : memref<16x1xf32, #tpu.memory_space<vmem>>, vector<16x1xf32>
    tpu.vector_store %arg8[%c0_17, %c0_18], %20 {strides = array<i32>} : memref<16x1xf32, #tpu.memory_space<vmem>>, vector<16x1xf32>,
    %c0_i32_19 = arith.constant 0 : i32
    %33 = arith.cmpi eq, %arg1, %c0_i32_19 : i32
    %34 = arith.extui %33 : i1 to i32
    %c0_i32_20 = arith.constant 0 : i32
    %35 = arith.cmpi ne, %34, %c0_i32_20 : i32
    scf.if %35 {
      %c0_21 = arith.constant 0 : index
      %c0_22 = arith.constant 0 : index
      %36 = vector.load %arg8[%c0_21, %c0_22] : memref<16x1xf32, #tpu.memory_space<vmem>>, vector<16x1xf32>
      %c0_23 = arith.constant 0 : index
      %c0_24 = arith.constant 0 : index
      %37 = vector.load %arg9[%c0_23, %c0_24] : memref<16x1xf32, #tpu.memory_space<vmem>>, vector<16x1xf32>
      %38 = math.log %37 : vector<16x1xf32>
      %39 = arith.addf %36, %38 : vector<16x1xf32>
      %c0_25 = arith.constant 0 : index
      %c0_26 = arith.constant 0 : index
      %40 = vector.load %arg5[%c0_25, %c0_26] : memref<16x1xf32, #tpu.memory_space<vmem>>, vector<16x1xf32>
      %41 = arith.subf %39, %40 : vector<16x1xf32>
      %c0_27 = arith.constant 0 : index
      %c0_28 = arith.constant 0 : index
      %42 = vector.load %arg6[%c0_27, %c0_28] : memref<16x1xf32, #tpu.memory_space<vmem>>, vector<16x1xf32>
      %cst_29 = arith.constant 0.000000e+00 : f32
      %43 = vector.broadcast %cst_29 : f32 to vector<16x1xf32>
      %44 = arith.cmpf ogt, %42, %43 : vector<16x1xf32>
      %cst_30 = arith.constant 0.000000e+00 : f32
      %45 = vector.broadcast %cst_30 : f32 to vector<16x1xf32>
      %46 = arith.select %44, %41, %45 : vector<16x1xi1>, vector<16x1xf32>
      %c0_31 = arith.constant 0 : index
      %c0_32 = arith.constant 0 : index
      %47 = vector.load %arg7[%c0_31, %c0_32] : memref<16x1xf32, #tpu.memory_space<vmem>>, vector<16x1xf32>
      tpu.vector_store %arg7[%c0_31, %c0_32], %46 {strides = array<i32>} : memref<16x1xf32, #tpu.memory_space<vmem>>, vector<16x1xf32>,
    } else {
    }
    return
  }
  func.func @transform_0(%arg0: i32, %arg1: i32) -> (i32, i32) {
    %c0_i32 = arith.constant 0 : i32
    %c0_i32_0 = arith.constant 0 : i32
    return %arg0, %c0_i32 : i32, i32
  }
  func.func @transform_1(%arg0: i32, %arg1: i32) -> (i32, i32) {
    %c0_i32 = arith.constant 0 : i32
    %c0_i32_0 = arith.constant 0 : i32
    return %c0_i32, %arg1 : i32, i32
  }
  func.func @transform_2(%arg0: i32, %arg1: i32) -> (i32, i32) {
    %c0_i32 = arith.constant 0 : i32
    %c0_i32_0 = arith.constant 0 : i32
    return %c0_i32, %arg1 : i32, i32
  }
  func.func @transform_3(%arg0: i32, %arg1: i32) -> (i32, i32) {
    %c0_i32 = arith.constant 0 : i32
    %c0_i32_0 = arith.constant 0 : i32
    return %arg0, %c0_i32 : i32, i32
  }
  func.func @transform_4(%arg0: i32, %arg1: i32) -> (i32, i32) {
    %c0_i32 = arith.constant 0 : i32
    %c0_i32_0 = arith.constant 0 : i32
    return %arg0, %c0_i32 : i32, i32
  }
  func.func @transform_5(%arg0: i32, %arg1: i32) -> (i32, i32) {
    %c0_i32 = arith.constant 0 : i32
    %c0_i32_0 = arith.constant 0 : i32
    return %arg0, %c0_i32 : i32, i32
  }
}

</mosaic_0001>

<llo_original>
// kernel: tpu_custom_call.1
$region0: #{tpu_custom_call.1}
  #allocation0 [shape = 'u32[]', space=smem, size = 0x4, offset = 0x4, fixed_abs, tag = 'smem constant byte address 0x4 - core index']
  #allocation1 [shape = 'u32[72,128]{1,0:T(1,128)}', space=vmem, size = 0x9000, scoped, tag = 'internal scratch']
  #allocation2 [shape = 'f32[16,1]{1,0:T(8,128)}', space=vmem, size = 0x2000, scoped, tag = 'scratch operand']
  #allocation3 [shape = 'f32[16,1]{1,0:T(8,128)}', space=vmem, size = 0x2000, scoped, tag = 'scratch operand']
  %s0 = inlined_call_operand.vmem [shape: f32[32,128], index: 0, kind: input, shape index: {}]
  %s1 = inlined_call_operand.hbm [shape: f32[128,128], index: 1, kind: input, shape index: {}]
  %s2 = inlined_call_operand.vmem [shape: f32[1,128], index: 2, kind: input, shape index: {}]
  %s3 = inlined_call_operand.vmem [shape: f32[16,1], index: 3, kind: input, shape index: {}]
  %s4 = inlined_call_operand.vmem [shape: f32[16,1], index: 4, kind: input, shape index: {}]
  %s5 = inlined_call_operand.vmem [shape: f32[16,1], index: 5, kind: output, shape index: {}]
  %s6 = sld [smem:[#allocation0]]
  $region42: #{tpu_custom_call.1} parent=0
    _
  %s8 = ssub.s32 1, %s6
  %s9 = scalar_select 0, %s8, %s6
  $region1: #{tpu_custom_call.1} parent=0
    #allocation4 [shape = 'u8[65536]{0}', space=vmem, size = 0x10000, scoped, tag = 'input window, operand 1, single buffered']
    #allocation5 [shape = 's32[1]{0}', space=sflag, size = 0x4, scoped, tag = 'scoped memory for tpu_custom_call.1']
    %10 = vsyncpa [#allocation5], 0
    // Predicated region
    $region2: #{tpu_custom_call.1} parent=1 // pred_check
      _
    $region3: #{tpu_custom_call.1} parent=1 // pred_check_branch
      %12 = sbr.rel (0) target = $region5
    $region4: #{tpu_custom_call.1} parent=1 // pred_region
      _
    $region5: #{tpu_custom_call.1} parent=1 // pred_fallthru
      _
    // Predicated region
    $region6: #{tpu_custom_call.1} parent=1 // pred_check
      _
    $region7: #{tpu_custom_call.1} parent=1 // pred_check_branch
      %14 = sbr.rel (0) target = $region9
    $region8: #{tpu_custom_call.1} parent=1 // pred_region
      %16 = vsyncadd [#allocation5], 0
      %s17 = sshll.u32 %s1, 4
      %s18 = int_to_ptr.hbm [resolvable:$true] %s17
      %s19 = sshll.u32 [#allocation4], 4
      %s20 = int_to_ptr.vmem [resolvable:$true] %s19
      %25 = dma.hbm_to_vmem [thread:$0]  %s18, 2048, %s20, [#allocation5], 128, 128, 8
    $region9: #{tpu_custom_call.1} parent=1 // pred_fallthru
      _
    // Predicated region
    $region10: #{tpu_custom_call.1} parent=1 // pred_check
      _
    $region11: #{tpu_custom_call.1} parent=1 // pred_check_branch
      %27 = sbr.rel (0) target = $region13
    $region12: #{tpu_custom_call.1} parent=1 // pred_region
      _
    $region13: #{tpu_custom_call.1} parent=1 // pred_fallthru
      _
    // Predicated region
    $region14: #{tpu_custom_call.1} parent=1 // pred_check
      _
    $region15: #{tpu_custom_call.1} parent=1 // pred_check_branch
      %29 = sbr.rel (0) target = $region17
    $region16: #{tpu_custom_call.1} parent=1 // pred_region
      _
    $region17: #{tpu_custom_call.1} parent=1 // pred_fallthru
      _
    // Predicated region
    $region18: #{tpu_custom_call.1} parent=1 // pred_check
      _
    $region19: #{tpu_custom_call.1} parent=1 // pred_check_branch
      %31 = sbr.rel (0) target = $region21
    $region20: #{tpu_custom_call.1} parent=1 // pred_region
      _
    $region21: #{tpu_custom_call.1} parent=1 // pred_fallthru
      _
    // Predicated region
    $region22: #{tpu_custom_call.1} parent=1 // pred_check
      _
    $region23: #{tpu_custom_call.1} parent=1 // pred_check_branch
      %33 = sbr.rel (0) target = $region25
    $region24: #{tpu_custom_call.1} parent=1 // pred_region
      %35 = dma.done [#allocation5], 2048
    $region25: #{tpu_custom_call.1} parent=1 // pred_fallthru
      _
    %p36 = scmp.eq.s32.totalorder 0, 0
    // Predicated region
    $region26: #{tpu_custom_call.1} parent=1 // pred_check
      %p37 = pneg %p36
    $region27: #{tpu_custom_call.1} parent=1 // pred_check_branch
      %39 = sbr.rel (%p37) target = $region29
    $region28: #{tpu_custom_call.1} parent=1 // pred_region
      %v40 = vld [vmem:[%s3] sm:$0xff]
      %v41 = vld [vmem:[%s3 + $0x8] sm:$0xff]
      %vm42 = vcmask 7168
      %43 = vst.msk [vmem:[#allocation2] sm:$0xff] %vm42, %v40
      %44 = vst.msk [vmem:[#allocation2 + $0x8] sm:$0xff] %vm42, %v41
      %45 = vst.msk [vmem:[#allocation3] sm:$0xff] %vm42, 1.0
      %46 = vst.msk [vmem:[#allocation3 + $0x8] sm:$0xff] %vm42, 1.0
    $region29: #{tpu_custom_call.1} parent=1 // pred_fallthru
      _
    %v47 = vld [vmem:[%s0] sm:$0xff]
    %v48 = vld [vmem:[%s0 + $0x8] sm:$0xff]
    %v49 = vld [vmem:[%s0 + $0x10] sm:$0xff]
    %v50 = vld [vmem:[%s0 + $0x18] sm:$0xff]
    %v51 = vld [vmem:[#allocation4] sm:$0xff]
    %v52 = vld [vmem:[#allocation4 + $0x8] sm:$0xff]
    %v53 = vld [vmem:[#allocation4 + $0x10] sm:$0xff]
    %v54 = vld [vmem:[#allocation4 + $0x18] sm:$0xff]
    %v55 = vld [vmem:[#allocation4 + $0x20] sm:$0xff]
    %v56 = vld [vmem:[#allocation4 + $0x28] sm:$0xff]
    %v57 = vld [vmem:[#allocation4 + $0x30] sm:$0xff]
    %v58 = vld [vmem:[#allocation4 + $0x38] sm:$0xff]
    %v59 = vld [vmem:[#allocation4 + $0x40] sm:$0xff]
    %v60 = vld [vmem:[#allocation4 + $0x48] sm:$0xff]
    %v61 = vld [vmem:[#allocation4 + $0x50] sm:$0xff]
    %v62 = vld [vmem:[#allocation4 + $0x58] sm:$0xff]
    %v63 = vld [vmem:[#allocation4 + $0x60] sm:$0xff]
    %v64 = vld [vmem:[#allocation4 + $0x68] sm:$0xff]
    %v65 = vld [vmem:[#allocation4 + $0x70] sm:$0xff]
    %v66 = vld [vmem:[#allocation4 + $0x78] sm:$0xff]
    %67 = vmatpush.msra.mxu0 %v66
    %68 = vmatpush.msra.mxu0 %v65
    %69 = vmatpush.msra.mxu0 %v64
    %70 = vmatpush.msra.mxu0 %v63
    %71 = vmatpush.msra.mxu0 %v62
    %72 = vmatpush.msra.mxu0 %v61
    %73 = vmatpush.msra.mxu0 %v60
    %74 = vmatpush.msra.mxu0 %v59
    %75 = vmatpush.msra.mxu0 %v58
    %76 = vmatpush.msra.mxu0 %v57
    %77 = vmatpush.msra.mxu0 %v56
    %78 = vmatpush.msra.mxu0 %v55
    %79 = vmatpush.msra.mxu0 %v54
    %80 = vmatpush.msra.mxu0 %v53
    %81 = vmatpush.msra.mxu0 %v52
    %82 = vmatpush.msra.mxu0 %v51
    %83 = vmatmul.f32.gmra.mxu0 %v47
    %v84 = vpop.f32.mrf.mxu0
    %v85 = vadd.f32 0.0, %v84
    %86 = vmatmul.f32.gmra.mxu0 %v48
    %v87 = vpop.f32.mrf.mxu0
    %v88 = vadd.f32 0.0, %v87
    %89 = vmatmul.f32.gmra.mxu0 %v49
    %v90 = vpop.f32.mrf.mxu0
    %v91 = vadd.f32 0.0, %v90
    %92 = vmatmul.f32.gmra.mxu0 %v50
    %v93 = vpop.f32.mrf.mxu0
    %v94 = vadd.f32 0.0, %v93
    %95 = vdwg.mxu0
    %vm96 = vcmp.gt.f32.partialorder %v91, 0.99
    %vm97 = vcmp.gt.f32.partialorder %v94, 0.99
    %v98 = vld [vmem:[%s2] sm:$0x1]
    %vm99 = vcmp.eq.f32.partialorder %v98, 0.0
    %v100 = vsel %vm99, 1, 0
    %v101 = vperm.slane %v100, 0
    %vm102 = vcmp.eq.s32.totalorder %v101, 1
    %vm103 = vmor %vm96, %vm102
    %vm104 = vmor %vm97, %vm102
    %v105 = vsel %vm103, -1e+30, %v85
    %v106 = vsel %vm104, -1e+30, %v88
    %v107 = vld [vmem:[#allocation2] sm:$0xff]
    %v108 = vld [vmem:[#allocation2 + $0x8] sm:$0xff]
    %109 = vmax.xlane.f32.xlu0 %v105
    %v110 = vpop.xlane.xlu0 %109
    %111 = vmax.xlane.f32.xlu0 %v106
    %v112 = vpop.xlane.xlu0 %111
    %v113 = vmax.f32 %v107, %v110
    %v114 = vmax.f32 %v108, %v112
    %v115 = vsub.f32 %v107, %v113
    %v116 = vsub.f32 %v108, %v114
    %v117 = vmul.f32 %v115, 1.442695
    %v118 = vpow.pop %v117
    %v119 = vmul.f32 %v116, 1.442695
    %v120 = vpow.pop %v119
    %v121 = vld [vmem:[#allocation3] sm:$0xff]
    %v122 = vld [vmem:[#allocation3 + $0x8] sm:$0xff]
    %v123 = vmul.f32 %v118, %v121
    %v124 = vmul.f32 %v120, %v122
    %126 = vset.pattern.permute.xlu0 0
    %127 = vperm.xlu0 %126, %v113
    %v128 = vpop.permute.xlu0 %127
    %131 = vset.pattern.permute.xlu0 0
    %132 = vperm.xlu0 %131, %v114
    %v133 = vpop.permute.xlu0 %132
    %v135 = vsub.f32 %v105, %v128
    %v136 = vsub.f32 %v106, %v133
    %v137 = vmul.f32 %v135, 1.442695
    %v138 = vpow.pop %v137
    %v139 = vmul.f32 %v136, 1.442695
    %v140 = vpow.pop %v139
    %141 = vadd.xlane.f32.xlu0 %v138
    %v142 = vpop.xlane.xlu0 %141
    %143 = vadd.xlane.f32.xlu0 %v140
    %v144 = vpop.xlane.xlu0 %143
    %v145 = vadd.f32 %v123, %v142
    %v146 = vadd.f32 %v124, %v144
    %vm147 = vcmask 7168
    %148 = vst.msk [vmem:[#allocation3] sm:$0xff] %vm147, %v145
    %149 = vst.msk [vmem:[#allocation3 + $0x8] sm:$0xff] %vm147, %v146
    %150 = vst.msk [vmem:[#allocation2] sm:$0xff] %vm147, %v113
    %151 = vst.msk [vmem:[#allocation2 + $0x8] sm:$0xff] %vm147, %v114
    // Predicated region
    $region30: #{tpu_custom_call.1} parent=1 // pred_check
      %p152 = pneg %p36
    $region31: #{tpu_custom_call.1} parent=1 // pred_check_branch
      %154 = sbr.rel (%p152) target = $region33
    $region32: #{tpu_custom_call.1} parent=1 // pred_region
      %v155 = vld [vmem:[#allocation2] sm:$0xff]
      %v156 = vld [vmem:[#allocation2 + $0x8] sm:$0xff]
      %v157 = vld [vmem:[#allocation3] sm:$0xff]
      %v158 = vld [vmem:[#allocation3 + $0x8] sm:$0xff]
      %v159 = vlog2.pop %v157
      %v160 = vmul.f32 %v159, 0.6931472
      %v161 = vlog2.pop %v158
      %v162 = vmul.f32 %v161, 0.6931472
      %v163 = vadd.f32 %v155, %v160
      %v164 = vadd.f32 %v156, %v162
      %v165 = vld [vmem:[%s3] sm:$0xff]
      %v166 = vld [vmem:[%s3 + $0x8] sm:$0xff]
      %v167 = vsub.f32 %v163, %v165
      %v168 = vsub.f32 %v164, %v166
      %v169 = vld [vmem:[%s4] sm:$0xff]
      %v170 = vld [vmem:[%s4 + $0x8] sm:$0xff]
      %vm171 = vcmp.gt.f32.partialorder %v169, 0.0
      %vm172 = vcmp.gt.f32.partialorder %v170, 0.0
      %v173 = vsel %vm171, %v167, 0.0
      %v174 = vsel %vm172, %v168, 0.0
      %175 = vst.msk [vmem:[%s5] sm:$0xff] %vm147, %v173
      %176 = vst.msk [vmem:[%s5 + $0x8] sm:$0xff] %vm147, %v174
    $region33: #{tpu_custom_call.1} parent=1 // pred_fallthru
      _
    // Predicated region
    $region34: #{tpu_custom_call.1} parent=1 // pred_check
      _
    $region35: #{tpu_custom_call.1} parent=1 // pred_check_branch
      %178 = sbr.rel (0) target = $region37
    $region36: #{tpu_custom_call.1} parent=1 // pred_region
      _
    $region37: #{tpu_custom_call.1} parent=1 // pred_fallthru
      _
    // Predicated region
    $region38: #{tpu_custom_call.1} parent=1 // pred_check
      _
    $region39: #{tpu_custom_call.1} parent=1 // pred_check_branch
      %180 = sbr.rel (0) target = $region41
    $region40: #{tpu_custom_call.1} parent=1 // pred_region
      _
    $region41: #{tpu_custom_call.1} parent=1 // pred_fallthru
      _
    %181 = vsyncpa [#allocation5], 1

</llo_original>
